<compile_context>
chip_gen: v6e
topology: v6e:2x2x1
jax: 0.10.0
libtpu: 0.0.40
codegen_flags: <defaults>
</compile_context>

<pallas_src>
import functools
import math

import jax
import jax.numpy as jnp
import numpy as np
from jax.experimental import pallas as pl
from jax.experimental.pallas import tpu as pltpu

EPS = 1e-5


def _round_up(x, m):
    return (x + m - 1) // m * m


def _vmem_limit_bytes():
    cap = 128 * 1024 * 1024
    try:
        c = getattr(pltpu.get_tpu_info(), "vmem_capacity_bytes", None)
        if isinstance(c, int) and c > 0:
            cap = c
    except Exception:
        pass
    return int(min(cap * 3 // 4, 96 * 1024 * 1024))


# ----------------------------------------------------------------------------
# Pass 1: lane-dense im2col matmul (block-diagonal weight) + per-tile
#         sum / sum-of-squares partials for training-mode BatchNorm.
# ----------------------------------------------------------------------------
def _conv_stats_kernel(xcol_ref, w_ref, conv_ref, stats_ref):
    # xcol_ref : (tile_ld, g*k)      lane-dense im2col row tile (compute dtype)
    # w_ref    : (g*k, g*c_out)      block-diagonal flattened weights (resident)
    # conv_ref : (tile_ld, g*c_out)  f32 conv output tile (unmasked stores)
    # stats_ref: (1, 2, g*c_out)     [sum, sum_sq] over this tile (per lane)
    acc = jnp.dot(xcol_ref[...], w_ref[...], preferred_element_type=jnp.float32)
    conv_ref[...] = acc
    s = jnp.sum(acc, axis=0, keepdims=True)           # (1, g*c_out)
    sq = jnp.sum(acc * acc, axis=0, keepdims=True)    # (1, g*c_out)
    stats_ref[...] = jnp.concatenate([s, sq], axis=0)[None, :, :]


# ----------------------------------------------------------------------------
# Pass 2: lane-dense fused scale/shift + ReLU (in place via aliasing).
# ----------------------------------------------------------------------------
def _bn_relu_kernel(conv_ref, scale_ref, shift_ref, out_ref):
    # conv_ref/out_ref: (tile2_ld, g*c_out); scale/shift: (1, g*c_out)
    y = conv_ref[...] * scale_ref[...] + shift_ref[...]
    out_ref[...] = jnp.maximum(y, 0.0).astype(out_ref.dtype)


@functools.partial(jax.jit,
                   static_argnames=("stride", "compute_dtype", "tile_rows"))
def conv_bn_relu_nhwc(x_nhwc, w_hwio, b, gamma, beta, *, stride=1,
                      compute_dtype=jnp.bfloat16, tile_rows=None):
    """Conv3x3(pad=1, stride) + training-mode BN + ReLU.  NHWC in / NHWC out."""
    del b  # conv bias cancels exactly under training-mode BN mean subtraction
    n, h, w, c_in = x_nhwc.shape
    c_out = w_hwio.shape[-1]
    ho = (h + 2 - 3) // stride + 1
    wo = (w + 2 - 3) // stride + 1
    rows = n * ho * wo
    k = 9 * c_in
    in_bytes = jnp.dtype(compute_dtype).itemsize

    # Lane-group factor g: pack g consecutive output pixels per lane-dense row
    # so every kernel array's last dim is a multiple of 128 lanes.  Capped so
    # the block-diagonal weight stays small / resident.
    g = 128 // math.gcd(128, c_out)
    while g > 1 and (g * k) * (g * c_out) * in_bytes > (8 << 20):
        g //= 2
    unit = 8 * g

    # Pass-1 row tile: ~12 MiB per grid step (double-buffered input + f32 conv
    # block) -- big blocks amortize the ~0.35 us per-step overhead.
    if tile_rows is None:
        per_row = 2 * k * in_bytes + 2 * 4 * c_out
        tile_rows = max(unit, (12 << 20) // per_row)
    tile_r = min(int(tile_rows), _round_up(rows, unit))
    tile_r = _round_up(max(tile_r, unit), unit)
    tile_ld = tile_r // g

    # Pass 2 is pure HBM streaming: fuse m pass-1 tiles per pass-2 block so
    # each block is ~4 MiB.
    m = max(1, (4 << 20) // (tile_r * c_out * 4))
    m = min(m, pl.cdiv(rows, tile_r))
    super_r = m * tile_r
    pad_rows = (-rows) % super_r
    rows_pad = rows + pad_rows
    num_tiles = rows_pad // tile_r
    grid2 = rows_pad // super_r
    tile2_ld = super_r // g
    rows_ld = rows_pad // g

    # ---- im2col (padding + stride resolved here; bf16 halves the traffic) ---
    xc = x_nhwc.astype(compute_dtype)
    x_pad = jnp.pad(xc, ((0, 0), (1, 1), (1, 1), (0, 0)))
    cols = []
    for kh in range(3):
        for kw in range(3):
            cols.append(x_pad[:, kh:kh + stride * ho:stride,
                              kw:kw + stride * wo:stride, :])
    xcol = jnp.concatenate(cols, axis=-1).reshape(rows, k)
    if pad_rows:
        xcol = jnp.pad(xcol, ((0, pad_rows), (0, 0)))   # zero rows: 0 to stats
    xcol_ld = xcol.reshape(rows_ld, g * k)              # free row-major reshape

    # Block-diagonal weight: W repeated g times on the diagonal so the matmul
    # output is directly lane-dense (g*c_out lanes).
    w_mat = w_hwio.reshape(k, c_out).astype(compute_dtype)
    w_bd = jnp.kron(jnp.eye(g, dtype=compute_dtype), w_mat)   # (g*k, g*c_out)

    cparams = pltpu.CompilerParams(
        dimension_semantics=("parallel",),
        vmem_limit_bytes=_vmem_limit_bytes(),
    )

    # ---- pass 1: conv + partial stats ---------------------------------------
    conv_ld, partial_stats = pl.pallas_call(
        _conv_stats_kernel,
        out_shape=(
            jax.ShapeDtypeStruct((rows_ld, g * c_out), jnp.float32),
            jax.ShapeDtypeStruct((num_tiles, 2, g * c_out), jnp.float32),
        ),
        grid=(num_tiles,),
        in_specs=[
            pl.BlockSpec((tile_ld, g * k), lambda i: (i, 0)),
            pl.BlockSpec((g * k, g * c_out), lambda i: (0, 0)),
        ],
        out_specs=(
            pl.BlockSpec((tile_ld, g * c_out), lambda i: (i, 0)),
            pl.BlockSpec((1, 2, g * c_out), lambda i: (i, 0, 0)),
        ),
        compiler_params=cparams,
    )(xcol_ld, w_bd)

    # ---- global batch stats -> fused per-channel scale/shift (tiny) ---------
    stats = jnp.sum(partial_stats, axis=0).reshape(2, g, c_out).sum(axis=1)
    count = jnp.float32(rows)
    mean = stats[0] / count
    var = jnp.maximum(stats[1] / count - mean * mean, 0.0)   # biased variance
    scale = gamma * jax.lax.rsqrt(var + EPS)
    shift = beta - mean * scale
    scale_ld = jnp.tile(scale, g).reshape(1, g * c_out)
    shift_ld = jnp.tile(shift, g).reshape(1, g * c_out)

    # ---- pass 2: lane-dense normalize + ReLU, in place -----------------------
    out_ld = pl.pallas_call(
        _bn_relu_kernel,
        out_shape=jax.ShapeDtypeStruct((rows_ld, g * c_out), jnp.float32),
        grid=(grid2,),
        in_specs=[
            pl.BlockSpec((tile2_ld, g * c_out), lambda i: (i, 0)),
            pl.BlockSpec((1, g * c_out), lambda i: (0, 0)),
            pl.BlockSpec((1, g * c_out), lambda i: (0, 0)),
        ],
        out_specs=pl.BlockSpec((tile2_ld, g * c_out), lambda i: (i, 0)),
        input_output_aliases={0: 0},
        compiler_params=cparams,
    )(conv_ld, scale_ld, shift_ld)

    out = out_ld.reshape(rows_pad, c_out)[:rows].reshape(n, ho, wo, c_out)
    return out


def conv_bn_relu(x_nchw, w_hwio, b, gamma, beta, *, stride=1,
                 compute_dtype=jnp.bfloat16, tile_rows=None):
    """PyTorch-parity wrapper: NCHW in / NCHW out (transposes are caller-side;
    use conv_bn_relu_nhwc to stay channels-last end-to-end)."""
    x_nhwc = jnp.transpose(x_nchw, (0, 2, 3, 1))
    out = conv_bn_relu_nhwc(x_nhwc, w_hwio, b, gamma, beta, stride=stride,
                            compute_dtype=compute_dtype, tile_rows=tile_rows)
    return jnp.transpose(out, (0, 3, 1, 2))


# ----------------------------------------------------------------------------
# Pure-JAX reference (conv + training-mode BN + ReLU), for validation.
# ----------------------------------------------------------------------------
def _reference(x_nchw, w_hwio, b, gamma, beta, *, stride=1):
    x_nhwc = jnp.transpose(x_nchw, (0, 2, 3, 1))
    conv = jax.lax.conv_general_dilated(
        x_nhwc, w_hwio, window_strides=(stride, stride),
        padding=((1, 1), (1, 1)),
        dimension_numbers=("NHWC", "HWIO", "NHWC"),
    ) + b[None, None, None, :]
    mean = jnp.mean(conv, axis=(0, 1, 2))
    var = jnp.mean((conv - mean) ** 2, axis=(0, 1, 2))
    y = gamma * (conv - mean) * jax.lax.rsqrt(var + EPS) + beta
    y = jnp.maximum(y, 0.0)
    return jnp.transpose(y, (0, 3, 1, 2))


if __name__ == "__main__":
    # Small shapes consistent with ConvBNRelu(channels_in=4, channels_out=8).
    N, C_IN, C_OUT, H, W = 2, 4, 8, 16, 16

    key = jax.random.PRNGKey(0)
    kx, kw, kb, kg, kbeta = jax.random.split(key, 5)

    x = jax.random.normal(kx, (N, C_IN, H, W), dtype=jnp.float32)
    w = jax.random.normal(kw, (3, 3, C_IN, C_OUT), dtype=jnp.float32) * 0.1  # HWIO
    b = jax.random.normal(kb, (C_OUT,), dtype=jnp.float32) * 0.1
    gamma = 1.0 + 0.1 * jax.random.normal(kg, (C_OUT,), dtype=jnp.float32)
    beta = 0.1 * jax.random.normal(kbeta, (C_OUT,), dtype=jnp.float32)

    # Exact parity path (f32 operands), both strides.
    for stride in (1, 2):
        out = jax.block_until_ready(
            conv_bn_relu(x, w, b, gamma, beta, stride=stride,
                         compute_dtype=jnp.float32))
        ref = jax.block_until_ready(
            _reference(x, w, b, gamma, beta, stride=stride))
        np.testing.assert_allclose(np.asarray(out), np.asarray(ref),
                                   rtol=1e-4, atol=1e-4)

    # Default bf16-operand path (f32 accumulation), looser tolerance.
    out_bf16 = jax.block_until_ready(conv_bn_relu(x, w, b, gamma, beta, stride=1))
    ref1 = jax.block_until_ready(_reference(x, w, b, gamma, beta, stride=1))
    np.testing.assert_allclose(np.asarray(out_bf16), np.asarray(ref1),
                               rtol=5e-2, atol=5e-2)

    print("KERNEL_OK")
</pallas_src>

<mosaic_0001>
module attributes {stable_mosaic.version = 11 : i64} {
  func.func @_conv_stats_kernel(%arg0: i32, %arg1: memref<32x576xf32, #tpu.memory_space<vmem>>, %arg2: memref<576x128xf32, #tpu.memory_space<vmem>>, %arg3: memref<32x128xf32, #tpu.memory_space<vmem>>, %arg4: memref<1x2x128xf32, #tpu.memory_space<vmem>>) attributes {dimension_semantics = [#tpu.dimension_semantics<parallel>], iteration_bounds = array<i64: 1>, scalar_prefetch = 0 : i64, scratch_operands = 0 : i64, tpu.core_type = #tpu.core_type<tc>, window_params = [{transform_indices = @transform_0, window_bounds = array<i64: 32, 576>}, {pipeline_mode = #tpu.pipeline_mode<synchronous>, transform_indices = @transform_1, window_bounds = array<i64: 576, 128>}, {transform_indices = @transform_2, window_bounds = array<i64: 32, 128>}, {transform_indices = @transform_3, window_bounds = array<i64: 1, 2, 128>}]} {
    %c0 = arith.constant 0 : index
    %c0_0 = arith.constant 0 : index
    %0 = vector.load %arg1[%c0, %c0_0] : memref<32x576xf32, #tpu.memory_space<vmem>>, vector<32x576xf32>
    %c0_1 = arith.constant 0 : index
    %c0_2 = arith.constant 0 : index
    %1 = vector.load %arg2[%c0_1, %c0_2] : memref<576x128xf32, #tpu.memory_space<vmem>>, vector<576x128xf32>
    %cst = arith.constant dense<0.000000e+00> : vector<32x128xf32>
    %2 = tpu.matmul %0, %1, %cst {dimension_numbers = #tpu.dot_dimension_numbers<[1], [0], [0], [1], [0, 0, 1, 1], [], []>} : vector<32x576xf32>, vector<576x128xf32>, vector<32x128xf32> -> vector<32x128xf32>
    %c0_3 = arith.constant 0 : index
    %c0_4 = arith.constant 0 : index
    %3 = vector.load %arg3[%c0_3, %c0_4] : memref<32x128xf32, #tpu.memory_space<vmem>>, vector<32x128xf32>
    tpu.vector_store %arg3[%c0_3, %c0_4], %2 {strides = array<i32>} : memref<32x128xf32, #tpu.memory_space<vmem>>, vector<32x128xf32>,
    %cst_5 = arith.constant dense<0.000000e+00> : vector<128xf32>
    %4 = vector.multi_reduction <add>, %2, %cst_5 [0] : vector<32x128xf32> to vector<128xf32>
    %5 = vector.shape_cast %4 : vector<128xf32> to vector<1x128xf32>
    %6 = arith.mulf %2, %2 : vector<32x128xf32>
    %cst_6 = arith.constant dense<0.000000e+00> : vector<128xf32>
    %7 = vector.multi_reduction <add>, %6, %cst_6 [0] : vector<32x128xf32> to vector<128xf32>
    %8 = vector.shape_cast %7 : vector<128xf32> to vector<1x128xf32>
    %9 = tpu.concatenate %5, %8 in 0 : vector<1x128xf32>, vector<1x128xf32> -> vector<2x128xf32>
    %10 = vector.shape_cast %9 : vector<2x128xf32> to vector<1x2x128xf32>
    %c0_7 = arith.constant 0 : index
    %c0_8 = arith.constant 0 : index
    %c0_9 = arith.constant 0 : index
    %11 = vector.load %arg4[%c0_7, %c0_8, %c0_9] : memref<1x2x128xf32, #tpu.memory_space<vmem>>, vector<1x2x128xf32>
    tpu.vector_store %arg4[%c0_7, %c0_8, %c0_9], %10 {strides = array<i32>} : memref<1x2x128xf32, #tpu.memory_space<vmem>>, vector<1x2x128xf32>,
    return
  }
  func.func @transform_0(%arg0: i32) -> (i32, i32) {
    %c0_i32 = arith.constant 0 : i32
    %c0_i32_0 = arith.constant 0 : i32
    return %arg0, %c0_i32 : i32, i32
  }
  func.func @transform_1(%arg0: i32) -> (i32, i32) {
    %c0_i32 = arith.constant 0 : i32
    %c0_i32_0 = arith.constant 0 : i32
    %c0_i32_1 = arith.constant 0 : i32
    return %c0_i32, %c0_i32_0 : i32, i32
  }
  func.func @transform_2(%arg0: i32) -> (i32, i32) {
    %c0_i32 = arith.constant 0 : i32
    %c0_i32_0 = arith.constant 0 : i32
    return %arg0, %c0_i32 : i32, i32
  }
  func.func @transform_3(%arg0: i32) -> (i32, i32, i32) {
    %c0_i32 = arith.constant 0 : i32
    %c0_i32_0 = arith.constant 0 : i32
    %c0_i32_1 = arith.constant 0 : i32
    return %arg0, %c0_i32, %c0_i32_0 : i32, i32, i32
  }
}

module attributes {stable_mosaic.version = 11 : i64} {
  func.func @_bn_relu_kernel(%arg0: i32, %arg1: memref<32x128xf32, #tpu.memory_space<vmem>>, %arg2: memref<1x128xf32, #tpu.memory_space<vmem>>, %arg3: memref<1x128xf32, #tpu.memory_space<vmem>>, %arg4: memref<32x128xf32, #tpu.memory_space<vmem>>) attributes {dimension_semantics = [#tpu.dimension_semantics<parallel>], iteration_bounds = array<i64: 1>, scalar_prefetch = 0 : i64, scratch_operands = 0 : i64, tpu.core_type = #tpu.core_type<tc>, window_params = [{transform_indices = @transform_0, window_bounds = array<i64: 32, 128>}, {pipeline_mode = #tpu.pipeline_mode<synchronous>, transform_indices = @transform_1, window_bounds = array<i64: 1, 128>}, {pipeline_mode = #tpu.pipeline_mode<synchronous>, transform_indices = @transform_2, window_bounds = array<i64: 1, 128>}, {transform_indices = @transform_3, window_bounds = array<i64: 32, 128>}]} {
    %c0 = arith.constant 0 : index
    %c0_0 = arith.constant 0 : index
    %0 = vector.load %arg1[%c0, %c0_0] : memref<32x128xf32, #tpu.memory_space<vmem>>, vector<32x128xf32>
    %c0_1 = arith.constant 0 : index
    %c0_2 = arith.constant 0 : index
    %1 = vector.load %arg2[%c0_1, %c0_2] : memref<1x128xf32, #tpu.memory_space<vmem>>, vector<1x128xf32>
    %2 = vector.broadcast %1 : vector<1x128xf32> to vector<32x128xf32>
    %3 = arith.mulf %0, %2 : vector<32x128xf32>
    %c0_3 = arith.constant 0 : index
    %c0_4 = arith.constant 0 : index
    %4 = vector.load %arg3[%c0_3, %c0_4] : memref<1x128xf32, #tpu.memory_space<vmem>>, vector<1x128xf32>
    %5 = vector.broadcast %4 : vector<1x128xf32> to vector<32x128xf32>
    %6 = arith.addf %3, %5 : vector<32x128xf32>
    %cst = arith.constant 0.000000e+00 : f32
    %7 = vector.broadcast %cst : f32 to vector<32x128xf32>
    %8 = arith.maximumf %6, %7 : vector<32x128xf32>
    %c0_5 = arith.constant 0 : index
    %c0_6 = arith.constant 0 : index
    %9 = vector.load %arg4[%c0_5, %c0_6] : memref<32x128xf32, #tpu.memory_space<vmem>>, vector<32x128xf32>
    tpu.vector_store %arg4[%c0_5, %c0_6], %8 {strides = array<i32>} : memref<32x128xf32, #tpu.memory_space<vmem>>, vector<32x128xf32>,
    return
  }
  func.func @transform_0(%arg0: i32) -> (i32, i32) {
    %c0_i32 = arith.constant 0 : i32
    %c0_i32_0 = arith.constant 0 : i32
    return %arg0, %c0_i32 : i32, i32
  }
  func.func @transform_1(%arg0: i32) -> (i32, i32) {
    %c0_i32 = arith.constant 0 : i32
    %c0_i32_0 = arith.constant 0 : i32
    %c0_i32_1 = arith.constant 0 : i32
    return %c0_i32, %c0_i32_0 : i32, i32
  }
  func.func @transform_2(%arg0: i32) -> (i32, i32) {
    %c0_i32 = arith.constant 0 : i32
    %c0_i32_0 = arith.constant 0 : i32
    %c0_i32_1 = arith.constant 0 : i32
    return %c0_i32, %c0_i32_0 : i32, i32
  }
  func.func @transform_3(%arg0: i32) -> (i32, i32) {
    %c0_i32 = arith.constant 0 : i32
    %c0_i32_0 = arith.constant 0 : i32
    return %arg0, %c0_i32 : i32, i32
  }
}

</mosaic_0001>

<llo_original>
// kernel: mul.4
$region0: #{mul.4}
  %s0 = inlined_call_operand.vmem [shape: f32[3,3,4,8], index: 0, kind: input, shape index: {}]
  %s1 = inlined_call_operand.vmem [shape: f32[36,8], index: 1, kind: output, shape index: {}]
  $region1: #{mul.4} parent=0
    #allocation0 [shape = 'u8[36864]{0}', space=vmem, size = 0x9000, scoped, tag = 'scoped mem for input reshape']
    %s3 = sshll.u32 1, 4
    %s4 = ssub.s32 %s3, 1
    %s5 = smul.addr 4, 8
    %s6 = scalar_lea.vmem %s0, %s5
    %v7 = vld [vmem:[%s6] sm:%s4]
    %s8 = scalar_lea.vmem [#allocation0], 64
    %9 = vst [vmem:[%s8] sm:%s4] %v7
    %s10 = smul.addr 4, 7
    %s11 = scalar_lea.vmem %s0, %s10
    %v12 = vld [vmem:[%s11] sm:%s4]
    %s13 = scalar_lea.vmem [#allocation0], 56
    %14 = vst [vmem:[%s13] sm:%s4] %v12
    %s15 = smul.addr 4, 6
    %s16 = scalar_lea.vmem %s0, %s15
    %v17 = vld [vmem:[%s16] sm:%s4]
    %s18 = scalar_lea.vmem [#allocation0], 48
    %19 = vst [vmem:[%s18] sm:%s4] %v17
    %s20 = smul.addr 4, 5
    %s21 = scalar_lea.vmem %s0, %s20
    %v22 = vld [vmem:[%s21] sm:%s4]
    %s23 = scalar_lea.vmem [#allocation0], 40
    %24 = vst [vmem:[%s23] sm:%s4] %v22
    %s25 = smul.addr 4, 4
    %s26 = scalar_lea.vmem %s0, %s25
    %v27 = vld [vmem:[%s26] sm:%s4]
    %s28 = scalar_lea.vmem [#allocation0], 32
    %29 = vst [vmem:[%s28] sm:%s4] %v27
    %s30 = smul.addr 4, 3
    %s31 = scalar_lea.vmem %s0, %s30
    %v32 = vld [vmem:[%s31] sm:%s4]
    %s33 = scalar_lea.vmem [#allocation0], 24
    %34 = vst [vmem:[%s33] sm:%s4] %v32
    %s35 = smul.addr 4, 2
    %s36 = scalar_lea.vmem %s0, %s35
    %v37 = vld [vmem:[%s36] sm:%s4]
    %s38 = scalar_lea.vmem [#allocation0], 16
    %39 = vst [vmem:[%s38] sm:%s4] %v37
    %s40 = scalar_lea.vmem %s0, 4
    %v41 = vld [vmem:[%s40] sm:%s4]
    %s42 = scalar_lea.vmem [#allocation0], 8
    %43 = vst [vmem:[%s42] sm:%s4] %v41
    %v44 = vld [vmem:[%s0] sm:%s4]
    %45 = vst [vmem:[#allocation0] sm:%s4] %v44
    %v46 = vld [vmem:[#allocation0] sm:$0xf]
    %vm47 = vcmask 64512
    %48 = vst.msk [vmem:[%s1] sm:$0xf] %vm47, %v46
    %s49 = scalar_lea.vmem [#allocation0], 8
    %v50 = vld [vmem:[%s49] sm:$0xf]
    %vm51 = vcmask 64512
    %s52 = scalar_lea.vmem %s1, 4
    %53 = vst.msk [vmem:[%s52] sm:$0xf] %vm51, %v50
    %s54 = scalar_lea.vmem [#allocation0], 16
    %v55 = vld [vmem:[%s54] sm:$0xf]
    %vm56 = vcmask 64512
    %s57 = scalar_lea.vmem %s1, 8
    %58 = vst.msk [vmem:[%s57] sm:$0xf] %vm56, %v55
    %s59 = scalar_lea.vmem [#allocation0], 24
    %v60 = vld [vmem:[%s59] sm:$0xf]
    %vm61 = vcmask 64512
    %s62 = scalar_lea.vmem %s1, 12
    %63 = vst.msk [vmem:[%s62] sm:$0xf] %vm61, %v60
    %s64 = scalar_lea.vmem [#allocation0], 32
    %v65 = vld [vmem:[%s64] sm:$0xf]
    %vm66 = vcmask 64512
    %s67 = scalar_lea.vmem %s1, 16
    %68 = vst.msk [vmem:[%s67] sm:$0xf] %vm66, %v65
    %s69 = scalar_lea.vmem [#allocation0], 40
    %v70 = vld [vmem:[%s69] sm:$0xf]
    %vm71 = vcmask 64512
    %s72 = scalar_lea.vmem %s1, 20
    %73 = vst.msk [vmem:[%s72] sm:$0xf] %vm71, %v70
    %s74 = scalar_lea.vmem [#allocation0], 48
    %v75 = vld [vmem:[%s74] sm:$0xf]
    %vm76 = vcmask 64512
    %s77 = scalar_lea.vmem %s1, 24
    %78 = vst.msk [vmem:[%s77] sm:$0xf] %vm76, %v75
    %s79 = scalar_lea.vmem [#allocation0], 56
    %v80 = vld [vmem:[%s79] sm:$0xf]
    %vm81 = vcmask 64512
    %s82 = scalar_lea.vmem %s1, 28
    %83 = vst.msk [vmem:[%s82] sm:$0xf] %vm81, %v80
    %s84 = scalar_lea.vmem [#allocation0], 64
    %v85 = vld [vmem:[%s84] sm:$0xf]
    %vm86 = vcmask 64512
    %s87 = scalar_lea.vmem %s1, 32
    %88 = vst.msk [vmem:[%s87] sm:$0xf] %vm86, %v85

// kernel: tile.13
$region0: #{tile.13}
  #allocation0 [shape = 's32[1]{0}', space=sflag, size = 0x4, scoped, tag = 'scoped memory for tile.13']
  %s0 = inlined_call_operand.vmem [shape: f32[8], index: 0, kind: input, shape index: {}]
  %s1 = inlined_call_operand.vmem [shape: f32[16,8], index: 1, kind: output, shape index: {}]
  // Predicated region
  $region2: #{tile.13} parent=0 // pred_check
    _
  $region3: #{tile.13} parent=0 // pred_check_branch
    %3 = sbr.rel (0) target = $region5
  $region4: #{tile.13} parent=0 // pred_region
    _
  $region5: #{tile.13} parent=0 // pred_fallthru
    _
  %v4 = vld [vmem:[%s0] ss:$0 sm:$0xff]
  %5 = vst [vmem:[%s1] sm:$0xff] %v4
  %s6 = scalar_lea.vmem %s1, 8
  %7 = vst [vmem:[%s6] sm:$0xff] %v4

// kernel: tile.14
$region0: #{tile.14}
  %s0 = inlined_call_operand.vmem [shape: f32[16,8], index: 0, kind: input, shape index: {}]
  %s1 = inlined_call_operand.vmem [shape: f32[1,128], index: 1, kind: output, shape index: {}]
  $region1: #{tile.14} parent=0
    #allocation0 [shape = 'u8[4096]{0}', space=vmem, size = 0x1000, scoped, tag = 'scoped mem for output reshape']
    %v2 = vld [vmem:[%s0] sm:$0x1]
    %vm3 = vcmask 64512
    %4 = vst.msk [vmem:[#allocation0] sm:$0x1] %vm3, %v2
    %s5 = scalar_lea.vmem %s0, 15
    %v6 = vld [vmem:[%s5] sm:$0x1]
    %7 = vrot.lane.b32.xlu0 %v6, 120
    %v8 = vpop.permute.xlu0 %7
    %vm9 = vcmask 1048512
    %10 = vst.msk [vmem:[#allocation0] sm:$0x1] %vm9, %v8
    %s11 = scalar_lea.vmem %s0, 14
    %v12 = vld [vmem:[%s11] sm:$0x1]
    %13 = vrot.lane.b32.xlu0 %v12, 112
    %v14 = vpop.permute.xlu0 %13
    %vm15 = vcmask 982912
    %16 = vst.msk [vmem:[#allocation0] sm:$0x1] %vm15, %v14
    %s17 = scalar_lea.vmem %s0, 13
    %v18 = vld [vmem:[%s17] sm:$0x1]
    %19 = vrot.lane.b32.xlu0 %v18, 104
    %v20 = vpop.permute.xlu0 %19
    %vm21 = vcmask 917312
    %22 = vst.msk [vmem:[#allocation0] sm:$0x1] %vm21, %v20
    %s23 = scalar_lea.vmem %s0, 12
    %v24 = vld [vmem:[%s23] sm:$0x1]
    %25 = vrot.lane.b32.xlu0 %v24, 96
    %v26 = vpop.permute.xlu0 %25
    %vm27 = vcmask 851712
    %28 = vst.msk [vmem:[#allocation0] sm:$0x1] %vm27, %v26
    %s29 = scalar_lea.vmem %s0, 11
    %v30 = vld [vmem:[%s29] sm:$0x1]
    %31 = vrot.lane.b32.xlu0 %v30, 88
    %v32 = vpop.permute.xlu0 %31
    %vm33 = vcmask 786112
    %34 = vst.msk [vmem:[#allocation0] sm:$0x1] %vm33, %v32
    %s35 = scalar_lea.vmem %s0, 10
    %v36 = vld [vmem:[%s35] sm:$0x1]
    %37 = vrot.lane.b32.xlu0 %v36, 80
    %v38 = vpop.permute.xlu0 %37
    %vm39 = vcmask 720512
    %40 = vst.msk [vmem:[#allocation0] sm:$0x1] %vm39, %v38
    %s41 = scalar_lea.vmem %s0, 9
    %v42 = vld [vmem:[%s41] sm:$0x1]
    %43 = vrot.lane.b32.xlu0 %v42, 72
    %v44 = vpop.permute.xlu0 %43
    %vm45 = vcmask 654912
    %46 = vst.msk [vmem:[#allocation0] sm:$0x1] %vm45, %v44
    %s47 = scalar_lea.vmem %s0, 8
    %v48 = vld [vmem:[%s47] sm:$0x1]
    %49 = vrot.lane.b32.xlu0 %v48, 64
    %v50 = vpop.permute.xlu0 %49
    %vm51 = vcmask 589312
    %52 = vst.msk [vmem:[#allocation0] sm:$0x1] %vm51, %v50
    %s53 = scalar_lea.vmem %s0, 7
    %v54 = vld [vmem:[%s53] sm:$0x1]
    %55 = vrot.lane.b32.xlu0 %v54, 56
    %v56 = vpop.permute.xlu0 %55
    %vm57 = vcmask 523712
    %58 = vst.msk [vmem:[#allocation0] sm:$0x1] %vm57, %v56
    %s59 = scalar_lea.vmem %s0, 6
    %v60 = vld [vmem:[%s59] sm:$0x1]
    %61 = vrot.lane.b32.xlu0 %v60, 48
    %v62 = vpop.permute.xlu0 %61
    %vm63 = vcmask 458112
    %64 = vst.msk [vmem:[#allocation0] sm:$0x1] %vm63, %v62
    %s65 = scalar_lea.vmem %s0, 5
    %v66 = vld [vmem:[%s65] sm:$0x1]
    %67 = vrot.lane.b32.xlu0 %v66, 40
    %v68 = vpop.permute.xlu0 %67
    %vm69 = vcmask 392512
    %70 = vst.msk [vmem:[#allocation0] sm:$0x1] %vm69, %v68
    %s71 = scalar_lea.vmem %s0, 4
    %v72 = vld [vmem:[%s71] sm:$0x1]
    %73 = vrot.lane.b32.xlu0 %v72, 32
    %v74 = vpop.permute.xlu0 %73
    %vm75 = vcmask 326912
    %76 = vst.msk [vmem:[#allocation0] sm:$0x1] %vm75, %v74
    %s77 = scalar_lea.vmem %s0, 3
    %v78 = vld [vmem:[%s77] sm:$0x1]
    %79 = vrot.lane.b32.xlu0 %v78, 24
    %v80 = vpop.permute.xlu0 %79
    %vm81 = vcmask 261312
    %82 = vst.msk [vmem:[#allocation0] sm:$0x1] %vm81, %v80
    %s83 = scalar_lea.vmem %s0, 2
    %v84 = vld [vmem:[%s83] sm:$0x1]
    %85 = vrot.lane.b32.xlu0 %v84, 16
    %v86 = vpop.permute.xlu0 %85
    %vm87 = vcmask 195712
    %88 = vst.msk [vmem:[#allocation0] sm:$0x1] %vm87, %v86
    %s89 = scalar_lea.vmem %s0, 1
    %v90 = vld [vmem:[%s89] sm:$0x1]
    %91 = vrot.lane.b32.xlu0 %v90, 8
    %v92 = vpop.permute.xlu0 %91
    %vm93 = vcmask 130112
    %94 = vst.msk [vmem:[#allocation0] sm:$0x1] %vm93, %v92
    %s96 = sshll.u32 1, 1
    %s97 = ssub.s32 %s96, 1
    %v99 = vld [vmem:[#allocation0] sm:%s97]
    %s100 = sshll.u32 1, 1
    %s101 = ssub.s32 %s100, 1
    %102 = vst [vmem:[%s1] sm:%s101] %v99

// kernel: conv_bn_relu_nhwc.3
$region0: #{conv_bn_relu_nhwc.3}
  #allocation0 [shape = 'u32[]', space=smem, size = 0x4, offset = 0x4, fixed_abs, tag = 'smem constant byte address 0x4 - core index']
  #allocation1 [shape = 'u32[144,128]{1,0:T(1,128)}', space=vmem, size = 0x12000, scoped, tag = 'internal scratch']
  %s0 = inlined_call_operand.vmem [shape: f32[32,128], index: 0, kind: input, shape index: {}, may-alias: {0,3}]
  %s1 = inlined_call_operand.vmem [shape: f32[1,128], index: 1, kind: input, shape index: {}]
  %s2 = inlined_call_operand.vmem [shape: f32[1,128], index: 2, kind: input, shape index: {}]
  %s3 = inlined_call_operand.vmem [shape: f32[32,128], index: 3, kind: output, shape index: {}, may-alias: {0,3}]
  %s4 = sld [smem:[#allocation0]]
  $region22: #{conv_bn_relu_nhwc.3} parent=0
    _
  %s6 = ssub.s32 1, %s4
  %s7 = scalar_select 0, %s6, %s4
  // Predicated region
  $region2: #{conv_bn_relu_nhwc.3} parent=0 // pred_check
    _
  $region3: #{conv_bn_relu_nhwc.3} parent=0 // pred_check_branch
    %9 = sbr.rel (0) target = $region5
  $region4: #{conv_bn_relu_nhwc.3} parent=0 // pred_region
    _
  $region5: #{conv_bn_relu_nhwc.3} parent=0 // pred_fallthru
    _
  // Predicated region
  $region6: #{conv_bn_relu_nhwc.3} parent=0 // pred_check
    _
  $region7: #{conv_bn_relu_nhwc.3} parent=0 // pred_check_branch
    %11 = sbr.rel (0) target = $region9
  $region8: #{conv_bn_relu_nhwc.3} parent=0 // pred_region
    _
  $region9: #{conv_bn_relu_nhwc.3} parent=0 // pred_fallthru
    _
  // Predicated region
  $region10: #{conv_bn_relu_nhwc.3} parent=0 // pred_check
    _
  $region11: #{conv_bn_relu_nhwc.3} parent=0 // pred_check_branch
    %13 = sbr.rel (0) target = $region13
  $region12: #{conv_bn_relu_nhwc.3} parent=0 // pred_region
    _
  $region13: #{conv_bn_relu_nhwc.3} parent=0 // pred_fallthru
    _
  %v14 = vld [vmem:[%s0] sm:$0xff]
  %v15 = vld [vmem:[%s0 + $0x8] sm:$0xff]
  %v16 = vld [vmem:[%s0 + $0x10] sm:$0xff]
  %v17 = vld [vmem:[%s0 + $0x18] sm:$0xff]
  %v18 = vld [vmem:[%s1] sm:$0x1]
  %v20 = vlaneseq
  %v21 = vshrl.u32 %v20, 7
  %v22 = vsub.s32 0, %v21
  %v23 = vrot.slane %v18, %v22
  %v25 = vmul.f32 %v14, %v23
  %v26 = vmul.f32 %v15, %v23
  %v27 = vmul.f32 %v16, %v23
  %v28 = vmul.f32 %v17, %v23
  %v29 = vld [vmem:[%s2] sm:$0x1]
  %v31 = vlaneseq
  %v32 = vshrl.u32 %v31, 7
  %v33 = vsub.s32 0, %v32
  %v34 = vrot.slane %v29, %v33
  %v36 = vadd.f32 %v25, %v34
  %v37 = vadd.f32 %v26, %v34
  %v38 = vadd.f32 %v27, %v34
  %v39 = vadd.f32 %v28, %v34
  %v40 = vmax.f32 %v36, 0.0
  %v41 = vmax.f32 %v37, 0.0
  %v42 = vmax.f32 %v38, 0.0
  %v43 = vmax.f32 %v39, 0.0
  %44 = vst [vmem:[%s3] sm:$0xff] %v40
  %45 = vst [vmem:[%s3 + $0x8] sm:$0xff] %v41
  %46 = vst [vmem:[%s3 + $0x10] sm:$0xff] %v42
  %47 = vst [vmem:[%s3 + $0x18] sm:$0xff] %v43
  // Predicated region
  $region14: #{conv_bn_relu_nhwc.3} parent=0 // pred_check
    _
  $region15: #{conv_bn_relu_nhwc.3} parent=0 // pred_check_branch
    %49 = sbr.rel (0) target = $region17
  $region16: #{conv_bn_relu_nhwc.3} parent=0 // pred_region
    _
  $region17: #{conv_bn_relu_nhwc.3} parent=0 // pred_fallthru
    _
  // Predicated region
  $region18: #{conv_bn_relu_nhwc.3} parent=0 // pred_check
    _
  $region19: #{conv_bn_relu_nhwc.3} parent=0 // pred_check_branch
    %51 = sbr.rel (0) target = $region21
  $region20: #{conv_bn_relu_nhwc.3} parent=0 // pred_region
    _
  $region21: #{conv_bn_relu_nhwc.3} parent=0 // pred_fallthru
    _

// kernel: conv_bn_relu_nhwc.2
$region0: #{conv_bn_relu_nhwc.2}
  #allocation0 [shape = 'u32[]', space=smem, size = 0x4, offset = 0x4, fixed_abs, tag = 'smem constant byte address 0x4 - core index']
  #allocation1 [shape = 'u32[144,128]{1,0:T(1,128)}', space=vmem, size = 0x12000, scoped, tag = 'internal scratch']
  %s0 = inlined_call_operand.vmem [shape: f32[32,576], index: 0, kind: input, shape index: {}]
  %s1 = inlined_call_operand.vmem [shape: f32[576,128], index: 1, kind: input, shape index: {}]
  %s2 = inlined_call_operand.vmem [shape: f32[32,128], index: 2, kind: output, shape index: {0}]
  %s3 = inlined_call_operand.vmem [shape: f32[1,2,128], index: 3, kind: output, shape index: {1}]
  %4 = xla_tuple %s2, %s3
  %s5 = sld [smem:[#allocation0]]
  $region26: #{conv_bn_relu_nhwc.2} parent=0
    _
  %s7 = ssub.s32 1, %s5
  %s8 = scalar_select 0, %s7, %s5
  // Predicated region
  $region2: #{conv_bn_relu_nhwc.2} parent=0 // pred_check
    _
  $region3: #{conv_bn_relu_nhwc.2} parent=0 // pred_check_branch
    %10 = sbr.rel (0) target = $region5
  $region4: #{conv_bn_relu_nhwc.2} parent=0 // pred_region
    _
  $region5: #{conv_bn_relu_nhwc.2} parent=0 // pred_fallthru
    _
  // Predicated region
  $region6: #{conv_bn_relu_nhwc.2} parent=0 // pred_check
    _
  $region7: #{conv_bn_relu_nhwc.2} parent=0 // pred_check_branch
    %12 = sbr.rel (0) target = $region9
  $region8: #{conv_bn_relu_nhwc.2} parent=0 // pred_region
    _
  $region9: #{conv_bn_relu_nhwc.2} parent=0 // pred_fallthru
    _
  %v13 = vld [vmem:[%s0] sm:$0xff]
  %v14 = vld [vmem:[%s0 + $0x8] sm:$0xff]
  %v15 = vld [vmem:[%s0 + $0x10] sm:$0xff]
  %v16 = vld [vmem:[%s0 + $0x18] sm:$0xff]
  %v17 = vld [vmem:[%s0 + $0x20] sm:$0xff]
  %v18 = vld [vmem:[%s0 + $0x28] sm:$0xff]
  %v19 = vld [vmem:[%s0 + $0x30] sm:$0xff]
  %v20 = vld [vmem:[%s0 + $0x38] sm:$0xff]
  %v21 = vld [vmem:[%s0 + $0x40] sm:$0xff]
  %v22 = vld [vmem:[%s0 + $0x48] sm:$0xff]
  %v23 = vld [vmem:[%s0 + $0x50] sm:$0xff]
  %v24 = vld [vmem:[%s0 + $0x58] sm:$0xff]
  %v25 = vld [vmem:[%s0 + $0x60] sm:$0xff]
  %v26 = vld [vmem:[%s0 + $0x68] sm:$0xff]
  %v27 = vld [vmem:[%s0 + $0x70] sm:$0xff]
  %v28 = vld [vmem:[%s0 + $0x78] sm:$0xff]
  %v29 = vld [vmem:[%s0 + $0x80] sm:$0xff]
  %v30 = vld [vmem:[%s0 + $0x88] sm:$0xff]
  %v31 = vld [vmem:[%s0 + $0x90] sm:$0xff]
  %v32 = vld [vmem:[%s0 + $0x98] sm:$0xff]
  %v33 = vld [vmem:[%s1] sm:$0xff]
  %v34 = vld [vmem:[%s1 + $0x8] sm:$0xff]
  %v35 = vld [vmem:[%s1 + $0x10] sm:$0xff]
  %v36 = vld [vmem:[%s1 + $0x18] sm:$0xff]
  %v37 = vld [vmem:[%s1 + $0x20] sm:$0xff]
  %v38 = vld [vmem:[%s1 + $0x28] sm:$0xff]
  %v39 = vld [vmem:[%s1 + $0x30] sm:$0xff]
  %v40 = vld [vmem:[%s1 + $0x38] sm:$0xff]
  %v41 = vld [vmem:[%s1 + $0x40] sm:$0xff]
  %v42 = vld [vmem:[%s1 + $0x48] sm:$0xff]
  %v43 = vld [vmem:[%s1 + $0x50] sm:$0xff]
  %v44 = vld [vmem:[%s1 + $0x58] sm:$0xff]
  %v45 = vld [vmem:[%s1 + $0x60] sm:$0xff]
  %v46 = vld [vmem:[%s1 + $0x68] sm:$0xff]
  %v47 = vld [vmem:[%s1 + $0x70] sm:$0xff]
  %v48 = vld [vmem:[%s1 + $0x78] sm:$0xff]
  %v49 = vld [vmem:[%s1 + $0x80] sm:$0xff]
  %v50 = vld [vmem:[%s1 + $0x88] sm:$0xff]
  %v51 = vld [vmem:[%s1 + $0x90] sm:$0xff]
  %v52 = vld [vmem:[%s1 + $0x98] sm:$0xff]
  %v53 = vld [vmem:[%s1 + $0xa0] sm:$0xff]
  %v54 = vld [vmem:[%s1 + $0xa8] sm:$0xff]
  %v55 = vld [vmem:[%s1 + $0xb0] sm:$0xff]
  %v56 = vld [vmem:[%s1 + $0xb8] sm:$0xff]
  %v57 = vld [vmem:[%s1 + $0xc0] sm:$0xff]
  %v58 = vld [vmem:[%s1 + $0xc8] sm:$0xff]
  %v59 = vld [vmem:[%s1 + $0xd0] sm:$0xff]
  %v60 = vld [vmem:[%s1 + $0xd8] sm:$0xff]
  %v61 = vld [vmem:[%s1 + $0xe0] sm:$0xff]
  %v62 = vld [vmem:[%s1 + $0xe8] sm:$0xff]
  %v63 = vld [vmem:[%s1 + $0xf0] sm:$0xff]
  %v64 = vld [vmem:[%s1 + $0xf8] sm:$0xff]
  %v65 = vld [vmem:[%s1 + $0x100] sm:$0xff]
  %v66 = vld [vmem:[%s1 + $0x108] sm:$0xff]
  %v67 = vld [vmem:[%s1 + $0x110] sm:$0xff]
  %v68 = vld [vmem:[%s1 + $0x118] sm:$0xff]
  %v69 = vld [vmem:[%s1 + $0x120] sm:$0xff]
  %v70 = vld [vmem:[%s1 + $0x128] sm:$0xff]
  %v71 = vld [vmem:[%s1 + $0x130] sm:$0xff]
  %v72 = vld [vmem:[%s1 + $0x138] sm:$0xff]
  %v73 = vld [vmem:[%s1 + $0x140] sm:$0xff]
  %v74 = vld [vmem:[%s1 + $0x148] sm:$0xff]
  %v75 = vld [vmem:[%s1 + $0x150] sm:$0xff]
  %v76 = vld [vmem:[%s1 + $0x158] sm:$0xff]
  %v77 = vld [vmem:[%s1 + $0x160] sm:$0xff]
  %v78 = vld [vmem:[%s1 + $0x168] sm:$0xff]
  %v79 = vld [vmem:[%s1 + $0x170] sm:$0xff]
  %v80 = vld [vmem:[%s1 + $0x178] sm:$0xff]
  %v81 = vld [vmem:[%s1 + $0x180] sm:$0xff]
  %v82 = vld [vmem:[%s1 + $0x188] sm:$0xff]
  %v83 = vld [vmem:[%s1 + $0x190] sm:$0xff]
  %v84 = vld [vmem:[%s1 + $0x198] sm:$0xff]
  %v85 = vld [vmem:[%s1 + $0x1a0] sm:$0xff]
  %v86 = vld [vmem:[%s1 + $0x1a8] sm:$0xff]
  %v87 = vld [vmem:[%s1 + $0x1b0] sm:$0xff]
  %v88 = vld [vmem:[%s1 + $0x1b8] sm:$0xff]
  %v89 = vld [vmem:[%s1 + $0x1c0] sm:$0xff]
  %v90 = vld [vmem:[%s1 + $0x1c8] sm:$0xff]
  %v91 = vld [vmem:[%s1 + $0x1d0] sm:$0xff]
  %v92 = vld [vmem:[%s1 + $0x1d8] sm:$0xff]
  %v93 = vld [vmem:[%s1 + $0x1e0] sm:$0xff]
  %v94 = vld [vmem:[%s1 + $0x1e8] sm:$0xff]
  %v95 = vld [vmem:[%s1 + $0x1f0] sm:$0xff]
  %v96 = vld [vmem:[%s1 + $0x1f8] sm:$0xff]
  %v97 = vld [vmem:[%s1 + $0x200] sm:$0xff]
  %v98 = vld [vmem:[%s1 + $0x208] sm:$0xff]
  %v99 = vld [vmem:[%s1 + $0x210] sm:$0xff]
  %v100 = vld [vmem:[%s1 + $0x218] sm:$0xff]
  %v101 = vld [vmem:[%s1 + $0x220] sm:$0xff]
  %v102 = vld [vmem:[%s1 + $0x228] sm:$0xff]
  %v103 = vld [vmem:[%s1 + $0x230] sm:$0xff]
  %v104 = vld [vmem:[%s1 + $0x238] sm:$0xff]
  %vm105 = vcmask 523264
  %v107 = vsel %vm105, %v17, 0
  %v110 = vsel %vm105, %v22, 0
  %v113 = vsel %vm105, %v27, 0
  %v116 = vsel %vm105, %v32, 0
  %118 = vmatprep.subr.mxu0 0.0
  %119 = vmatpush1.msra.mxu0 %v48
  %120 = vmatprep.subr.mxu0 0.0
  %121 = vmatpush1.msra.mxu0 %v47
  %122 = vmatprep.subr.mxu0 0.0
  %123 = vmatpush1.msra.mxu0 %v46
  %124 = vmatprep.subr.mxu0 0.0
  %125 = vmatpush1.msra.mxu0 %v45
  %126 = vmatprep.subr.mxu0 0.0
  %127 = vmatpush1.msra.mxu0 %v44
  %128 = vmatprep.subr.mxu0 0.0
  %129 = vmatpush1.msra.mxu0 %v43
  %130 = vmatprep.subr.mxu0 0.0
  %131 = vmatpush1.msra.mxu0 %v42
  %132 = vmatprep.subr.mxu0 0.0
  %133 = vmatpush1.msra.mxu0 %v41
  %134 = vmatprep.subr.mxu0 0.0
  %135 = vmatpush1.msra.mxu0 %v40
  %136 = vmatprep.subr.mxu0 0.0
  %137 = vmatpush1.msra.mxu0 %v39
  %138 = vmatprep.subr.mxu0 0.0
  %139 = vmatpush1.msra.mxu0 %v38
  %140 = vmatprep.subr.mxu0 0.0
  %141 = vmatpush1.msra.mxu0 %v37
  %142 = vmatprep.subr.mxu0 0.0
  %143 = vmatpush1.msra.mxu0 %v36
  %144 = vmatprep.subr.mxu0 0.0
  %145 = vmatpush1.msra.mxu0 %v35
  %146 = vmatprep.subr.mxu0 0.0
  %147 = vmatpush1.msra.mxu0 %v34
  %148 = vmatprep.subr.mxu0 0.0
  %149 = vmatpush1.msra.mxu0 %v33
  %150 = vmatprep.subr.mxu0 0.0
  %151 = vmatpush2.msra.mxu0 %v64
  %152 = vmatprep.subr.mxu0 0.0
  %153 = vmatpush2.msra.mxu0 %v63
  %154 = vmatprep.subr.mxu0 0.0
  %155 = vmatpush2.msra.mxu0 %v62
  %156 = vmatprep.subr.mxu0 0.0
  %157 = vmatpush2.msra.mxu0 %v61
  %158 = vmatprep.subr.mxu0 0.0
  %159 = vmatpush2.msra.mxu0 %v60
  %160 = vmatprep.subr.mxu0 0.0
  %161 = vmatpush2.msra.mxu0 %v59
  %162 = vmatprep.subr.mxu0 0.0
  %163 = vmatpush2.msra.mxu0 %v58
  %164 = vmatprep.subr.mxu0 0.0
  %165 = vmatpush2.msra.mxu0 %v57
  %166 = vmatprep.subr.mxu0 0.0
  %167 = vmatpush2.msra.mxu0 %v56
  %168 = vmatprep.subr.mxu0 0.0
  %169 = vmatpush2.msra.mxu0 %v55
  %170 = vmatprep.subr.mxu0 0.0
  %171 = vmatpush2.msra.mxu0 %v54
  %172 = vmatprep.subr.mxu0 0.0
  %173 = vmatpush2.msra.mxu0 %v53
  %174 = vmatprep.subr.mxu0 0.0
  %175 = vmatpush2.msra.mxu0 %v52
  %176 = vmatprep.subr.mxu0 0.0
  %177 = vmatpush2.msra.mxu0 %v51
  %178 = vmatprep.subr.mxu0 0.0
  %179 = vmatpush2.msra.mxu0 %v50
  %180 = vmatprep.subr.mxu0 0.0
  %181 = vmatpush2.msra.mxu0 %v49
  %182 = vmatprep.mubr.f32.mxu0 %v14
  %183 = vmatmul.mubr.f32.gmra.mxu0 %v13
  %v184 = vpop.f32.mrf.mxu0
  %v185 = vadd.f32 0.0, %v184
  %v186 = vpop.f32.mrf.mxu0
  %187 = vmatprep.mubr.f32.mxu0 %v19
  %188 = vmatmul.mubr.f32.gmra.mxu0 %v18
  %v189 = vpop.f32.mrf.mxu0
  %v190 = vadd.f32 0.0, %v189
  %v191 = vpop.f32.mrf.mxu0
  %192 = vmatprep.mubr.f32.mxu0 %v24
  %193 = vmatmul.mubr.f32.gmra.mxu0 %v23
  %v194 = vpop.f32.mrf.mxu0
  %v195 = vadd.f32 0.0, %v194
  %v196 = vpop.f32.mrf.mxu0
  %197 = vmatprep.mubr.f32.mxu0 %v29
  %198 = vmatmul.mubr.f32.gmra.mxu0 %v28
  %v199 = vpop.f32.mrf.mxu0
  %v200 = vadd.f32 0.0, %v199
  %v201 = vpop.f32.mrf.mxu0
  %202 = vdwg.mxu0
  %203 = vmatprep.subr.mxu0 0.0
  %204 = vmatpush1.msra.mxu0 %v80
  %205 = vmatprep.subr.mxu0 0.0
  %206 = vmatpush1.msra.mxu0 %v79
  %207 = vmatprep.subr.mxu0 0.0
  %208 = vmatpush1.msra.mxu0 %v78
  %209 = vmatprep.subr.mxu0 0.0
  %210 = vmatpush1.msra.mxu0 %v77
  %211 = vmatprep.subr.mxu0 0.0
  %212 = vmatpush1.msra.mxu0 %v76
  %213 = vmatprep.subr.mxu0 0.0
  %214 = vmatpush1.msra.mxu0 %v75
  %215 = vmatprep.subr.mxu0 0.0
  %216 = vmatpush1.msra.mxu0 %v74
  %217 = vmatprep.subr.mxu0 0.0
  %218 = vmatpush1.msra.mxu0 %v73
  %219 = vmatprep.subr.mxu0 0.0
  %220 = vmatpush1.msra.mxu0 %v72
  %221 = vmatprep.subr.mxu0 0.0
  %222 = vmatpush1.msra.mxu0 %v71
  %223 = vmatprep.subr.mxu0 0.0
  %224 = vmatpush1.msra.mxu0 %v70
  %225 = vmatprep.subr.mxu0 0.0
  %226 = vmatpush1.msra.mxu0 %v69
  %227 = vmatprep.subr.mxu0 0.0
  %228 = vmatpush1.msra.mxu0 %v68
  %229 = vmatprep.subr.mxu0 0.0
  %230 = vmatpush1.msra.mxu0 %v67
  %231 = vmatprep.subr.mxu0 0.0
  %232 = vmatpush1.msra.mxu0 %v66
  %233 = vmatprep.subr.mxu0 0.0
  %234 = vmatpush1.msra.mxu0 %v65
  %235 = vmatprep.subr.mxu0 0.0
  %236 = vmatpush2.msra.mxu0 %v96
  %237 = vmatprep.subr.mxu0 0.0
  %238 = vmatpush2.msra.mxu0 %v95
  %239 = vmatprep.subr.mxu0 0.0
  %240 = vmatpush2.msra.mxu0 %v94
  %241 = vmatprep.subr.mxu0 0.0
  %242 = vmatpush2.msra.mxu0 %v93
  %243 = vmatprep.subr.mxu0 0.0
  %244 = vmatpush2.msra.mxu0 %v92
  %245 = vmatprep.subr.mxu0 0.0
  %246 = vmatpush2.msra.mxu0 %v91
  %247 = vmatprep.subr.mxu0 0.0
  %248 = vmatpush2.msra.mxu0 %v90
  %249 = vmatprep.subr.mxu0 0.0
  %250 = vmatpush2.msra.mxu0 %v89
  %251 = vmatprep.subr.mxu0 0.0
  %252 = vmatpush2.msra.mxu0 %v88
  %253 = vmatprep.subr.mxu0 0.0
  %254 = vmatpush2.msra.mxu0 %v87
  %255 = vmatprep.subr.mxu0 0.0
  %256 = vmatpush2.msra.mxu0 %v86
  %257 = vmatprep.subr.mxu0 0.0
  %258 = vmatpush2.msra.mxu0 %v85
  %259 = vmatprep.subr.mxu0 0.0
  %260 = vmatpush2.msra.mxu0 %v84
  %261 = vmatprep.subr.mxu0 0.0
  %262 = vmatpush2.msra.mxu0 %v83
  %263 = vmatprep.subr.mxu0 0.0
  %264 = vmatpush2.msra.mxu0 %v82
  %265 = vmatprep.subr.mxu0 0.0
  %266 = vmatpush2.msra.mxu0 %v81
  %267 = vmatprep.mubr.f32.mxu0 %v16
  %268 = vmatmul.mubr.f32.gmra.mxu0 %v15
  %v269 = vpop.f32.mrf.mxu0
  %v270 = vadd.f32 %v185, %v269
  %v271 = vpop.f32.mrf.mxu0
  %272 = vmatprep.mubr.f32.mxu0 %v21
  %273 = vmatmul.mubr.f32.gmra.mxu0 %v20
  %v274 = vpop.f32.mrf.mxu0
  %v275 = vadd.f32 %v190, %v274
  %v276 = vpop.f32.mrf.mxu0
  %277 = vmatprep.mubr.f32.mxu0 %v26
  %278 = vmatmul.mubr.f32.gmra.mxu0 %v25
  %v279 = vpop.f32.mrf.mxu0
  %v280 = vadd.f32 %v195, %v279
  %v281 = vpop.f32.mrf.mxu0
  %282 = vmatprep.mubr.f32.mxu0 %v31
  %283 = vmatmul.mubr.f32.gmra.mxu0 %v30
  %v284 = vpop.f32.mrf.mxu0
  %v285 = vadd.f32 %v200, %v284
  %v286 = vpop.f32.mrf.mxu0
  %287 = vdwg.mxu0
  %288 = vmatprep.subr.mxu0 0.0
  %289 = vmatpush1.msra.mxu0 0.0
  %290 = vmatprep.subr.mxu0 0.0
  %291 = vmatpush1.msra.mxu0 0.0
  %292 = vmatprep.subr.mxu0 0.0
  %293 = vmatpush1.msra.mxu0 0.0
  %294 = vmatprep.subr.mxu0 0.0
  %295 = vmatpush1.msra.mxu0 0.0
  %296 = vmatprep.subr.mxu0 0.0
  %297 = vmatpush1.msra.mxu0 0.0
  %298 = vmatprep.subr.mxu0 0.0
  %299 = vmatpush1.msra.mxu0 0.0
  %300 = vmatprep.subr.mxu0 0.0
  %301 = vmatpush1.msra.mxu0 0.0
  %302 = vmatprep.subr.mxu0 0.0
  %303 = vmatpush1.msra.mxu0 0.0
  %304 = vmatprep.subr.mxu0 0.0
  %305 = vmatpush1.msra.mxu0 %v104
  %306 = vmatprep.subr.mxu0 0.0
  %307 = vmatpush1.msra.mxu0 %v103
  %308 = vmatprep.subr.mxu0 0.0
  %309 = vmatpush1.msra.mxu0 %v102
  %310 = vmatprep.subr.mxu0 0.0
  %311 = vmatpush1.msra.mxu0 %v101
  %312 = vmatprep.subr.mxu0 0.0
  %313 = vmatpush1.msra.mxu0 %v100
  %314 = vmatprep.subr.mxu0 0.0
  %315 = vmatpush1.msra.mxu0 %v99
  %316 = vmatprep.subr.mxu0 0.0
  %317 = vmatpush1.msra.mxu0 %v98
  %318 = vmatprep.subr.mxu0 0.0
  %319 = vmatpush1.msra.mxu0 %v97
  %320 = vmatprep.subr.mxu0 0.0
  %321 = vmatpush2.msra.mxu0 0.0
  %322 = vmatprep.subr.mxu0 0.0
  %323 = vmatpush2.msra.mxu0 0.0
  %324 = vmatprep.subr.mxu0 0.0
  %325 = vmatpush2.msra.mxu0 0.0
  %326 = vmatprep.subr.mxu0 0.0
  %327 = vmatpush2.msra.mxu0 0.0
  %328 = vmatprep.subr.mxu0 0.0
  %329 = vmatpush2.msra.mxu0 0.0
  %330 = vmatprep.subr.mxu0 0.0
  %331 = vmatpush2.msra.mxu0 0.0
  %332 = vmatprep.subr.mxu0 0.0
  %333 = vmatpush2.msra.mxu0 0.0
  %334 = vmatprep.subr.mxu0 0.0
  %335 = vmatpush2.msra.mxu0 0.0
  %336 = vmatprep.subr.mxu0 0.0
  %337 = vmatpush2.msra.mxu0 0.0
  %338 = vmatprep.subr.mxu0 0.0
  %339 = vmatpush2.msra.mxu0 0.0
  %340 = vmatprep.subr.mxu0 0.0
  %341 = vmatpush2.msra.mxu0 0.0
  %342 = vmatprep.subr.mxu0 0.0
  %343 = vmatpush2.msra.mxu0 0.0
  %344 = vmatprep.subr.mxu0 0.0
  %345 = vmatpush2.msra.mxu0 0.0
  %346 = vmatprep.subr.mxu0 0.0
  %347 = vmatpush2.msra.mxu0 0.0
  %348 = vmatprep.subr.mxu0 0.0
  %349 = vmatpush2.msra.mxu0 0.0
  %350 = vmatprep.subr.mxu0 0.0
  %351 = vmatpush2.msra.mxu0 0.0
  %352 = vmatprep.mubr.f32.mxu0 0.0
  %353 = vmatmul.mubr.f32.gmra.mxu0 %v107
  %v354 = vpop.f32.mrf.mxu0
  %v355 = vadd.f32 %v270, %v354
  %v356 = vpop.f32.mrf.mxu0
  %357 = vmatprep.mubr.f32.mxu0 0.0
  %358 = vmatmul.mubr.f32.gmra.mxu0 %v110
  %v359 = vpop.f32.mrf.mxu0
  %v360 = vadd.f32 %v275, %v359
  %v361 = vpop.f32.mrf.mxu0
  %362 = vmatprep.mubr.f32.mxu0 0.0
  %363 = vmatmul.mubr.f32.gmra.mxu0 %v113
  %v364 = vpop.f32.mrf.mxu0
  %v365 = vadd.f32 %v280, %v364
  %v366 = vpop.f32.mrf.mxu0
  %367 = vmatprep.mubr.f32.mxu0 0.0
  %368 = vmatmul.mubr.f32.gmra.mxu0 %v116
  %v369 = vpop.f32.mrf.mxu0
  %v370 = vadd.f32 %v285, %v369
  %v371 = vpop.f32.mrf.mxu0
  %372 = vdwg.mxu0
  %373 = vst [vmem:[%s2] sm:$0xff] %v355
  %374 = vst [vmem:[%s2 + $0x8] sm:$0xff] %v360
  %375 = vst [vmem:[%s2 + $0x10] sm:$0xff] %v365
  %376 = vst [vmem:[%s2 + $0x18] sm:$0xff] %v370
  %v377 = vadd.f32 %v355, %v360
  %v378 = vadd.f32 %v377, %v365
  %v379 = vadd.f32 %v378, %v370
  %v380 = vrot.slane %v379, 4
  %v381 = vadd.f32 %v379, %v380
  %v382 = vrot.slane %v381, 2
  %v383 = vadd.f32 %v381, %v382
  %v384 = vrot.slane %v383, 1
  %v385 = vadd.f32 %v383, %v384
  %v386 = vmul.f32 %v355, %v355
  %v387 = vmul.f32 %v360, %v360
  %v388 = vmul.f32 %v365, %v365
  %v389 = vmul.f32 %v370, %v370
  %v390 = vadd.f32 %v386, %v387
  %v391 = vadd.f32 %v390, %v388
  %v392 = vadd.f32 %v391, %v389
  %v393 = vrot.slane %v392, 4
  %v394 = vadd.f32 %v392, %v393
  %v395 = vrot.slane %v394, 2
  %v396 = vadd.f32 %v394, %v395
  %v397 = vrot.slane %v396, 1
  %v398 = vadd.f32 %v396, %v397
  %vm399 = vcmask 1040384
  %v400 = vsel %vm399, %v385, %v398
  %401 = vst [vmem:[%s3] sm:$0x3] %v400
  // Predicated region
  $region10: #{conv_bn_relu_nhwc.2} parent=0 // pred_check
    _
  $region11: #{conv_bn_relu_nhwc.2} parent=0 // pred_check_branch
    %403 = sbr.rel (0) target = $region13
  $region12: #{conv_bn_relu_nhwc.2} parent=0 // pred_region
    _
  $region13: #{conv_bn_relu_nhwc.2} parent=0 // pred_fallthru
    _
  // Predicated region
  $region14: #{conv_bn_relu_nhwc.2} parent=0 // pred_check
    _
  $region15: #{conv_bn_relu_nhwc.2} parent=0 // pred_check_branch
    %405 = sbr.rel (0) target = $region17
  $region16: #{conv_bn_relu_nhwc.2} parent=0 // pred_region
    _
  $region17: #{conv_bn_relu_nhwc.2} parent=0 // pred_fallthru
    _
  // Predicated region
  $region18: #{conv_bn_relu_nhwc.2} parent=0 // pred_check
    _
  $region19: #{conv_bn_relu_nhwc.2} parent=0 // pred_check_branch
    %407 = sbr.rel (0) target = $region21
  $region20: #{conv_bn_relu_nhwc.2} parent=0 // pred_region
    _
  $region21: #{conv_bn_relu_nhwc.2} parent=0 // pred_fallthru
    _
  // Predicated region
  $region22: #{conv_bn_relu_nhwc.2} parent=0 // pred_check
    _
  $region23: #{conv_bn_relu_nhwc.2} parent=0 // pred_check_branch
    %409 = sbr.rel (0) target = $region25
  $region24: #{conv_bn_relu_nhwc.2} parent=0 // pred_region
    _
  $region25: #{conv_bn_relu_nhwc.2} parent=0 // pred_fallthru
    _

</llo_original>
